<compile_context>
chip_gen: v5e
topology: v5e:2x2
jax: 0.10.0
libtpu: 0.0.40
codegen_flags: <defaults>
</compile_context>

<pallas_src>
import jax
import jax.numpy as jnp
from jax.experimental import pallas as pl
from jax.experimental.pallas import tpu as pltpu

# Network definition (matches DeepNN([32, 64, 64, 16], nn.Tanh()))
LAYERS = [32, 64, 64, 16]
D_IN = LAYERS[0]
D_OUT = LAYERS[-1]
PAD = 128          # lane width: all hidden feature dims padded to this

# bf16 parameter-slab row offsets.  Every block starts on a multiple of 16
# (bf16 sublane tile) so all in-kernel slices are tile-aligned.  Unused
# rows/cols are zero, which keeps the padded activation columns exactly 0
# (tanh(0 + 0) = 0) and therefore harmless.
W0_OFF, W0_ROWS = 0, D_IN        # (32, 128):  real W0 in [:, :64]
B0_OFF = 32                      # 1 real row
W1_OFF, W1_ROWS = 48, PAD        # (128, 128): real W1 in [:64, :64]
B1_OFF = 176
W2_OFF, W2_ROWS = 192, PAD       # (128, 128): real W2 in [:64, :16]
B2_OFF = 320
SLAB_ROWS = 336                  # multiple of 16; slab = 336 x 128 bf16 ~= 84 KiB


def mlp_kernel(x_ref, p_ref, o_ref):
    """Fused 3-layer MLP on one batch tile, everything in VMEM.

    h0 = tanh(x  @ W0 + b0)
    h1 = tanh(h0 @ W1 + b1)
    y  =      h1 @ W2 + b2      (no activation after the last Linear)
    """
    f32 = jnp.float32
    x = x_ref[...].astype(jnp.bfloat16)                                  # (B, 32)

    h = jnp.dot(x, p_ref[W0_OFF:W0_OFF + W0_ROWS, :],
                preferred_element_type=f32)
    h = jnp.tanh(h + p_ref[B0_OFF:B0_OFF + 1, :].astype(f32))           # (B, 128) f32

    h = jnp.dot(h.astype(jnp.bfloat16), p_ref[W1_OFF:W1_OFF + W1_ROWS, :],
                preferred_element_type=f32)
    h = jnp.tanh(h + p_ref[B1_OFF:B1_OFF + 1, :].astype(f32))           # (B, 128) f32

    y = jnp.dot(h.astype(jnp.bfloat16), p_ref[W2_OFF:W2_OFF + W2_ROWS, :],
                preferred_element_type=f32)
    y = y + p_ref[B2_OFF:B2_OFF + 1, :].astype(f32)                     # (B, 128) f32

    # Store only the real output columns (padded cols 16..127 are exactly 0).
    o_ref[...] = y[:, :D_OUT]                                           # (B, 16) f32


def deep_nn_forward(x, slab, *, batch_tile=256):
    """x: (B, 32) f32.  slab: packed (SLAB_ROWS, PAD) bf16 parameters -> (B, 16) f32.

    For v5e prefer batch_tile=128 (4x128^2 MXU); 256 matches v6e/v7x.
    """
    B = x.shape[0]
    out_shape = jax.ShapeDtypeStruct((B, D_OUT), jnp.float32)

    if B <= batch_tile or B % batch_tile != 0:
        # Latency path: no grid, single invocation, whole problem resident in VMEM.
        return pl.pallas_call(
            mlp_kernel,
            out_shape=out_shape,
            in_specs=[
                pl.BlockSpec(memory_space=pltpu.MemorySpace.VMEM),   # x
                pl.BlockSpec(memory_space=pltpu.MemorySpace.VMEM),   # param slab
            ],
            out_specs=pl.BlockSpec(memory_space=pltpu.MemorySpace.VMEM),
        )(x, slab)

    # Throughput path: 1-D parallel grid over batch tiles.  The slab's index_map
    # is constant, so it is fetched once and stays resident; x / out tiles are
    # pipelined by BlockSpec; the parallel axis shards across TCs on v7x.
    grid = (B // batch_tile,)
    return pl.pallas_call(
        mlp_kernel,
        out_shape=out_shape,
        grid_spec=pltpu.PrefetchScalarGridSpec(
            num_scalar_prefetch=0,
            grid=grid,
            in_specs=[
                pl.BlockSpec((batch_tile, D_IN), lambda i: (i, 0)),     # x tile
                pl.BlockSpec((SLAB_ROWS, PAD), lambda i: (0, 0)),       # resident slab
            ],
            out_specs=pl.BlockSpec((batch_tile, D_OUT), lambda i: (i, 0)),
        ),
        compiler_params=pltpu.CompilerParams(
            dimension_semantics=("parallel",)),
    )(x, slab)


def init_params(key, layers):
    """Deterministic init mimicking nn.Linear's uniform(-1/sqrt(in), 1/sqrt(in))."""
    params = []
    for j in range(len(layers) - 1):
        fan_in, fan_out = layers[j], layers[j + 1]
        key, kw, kb = jax.random.split(key, 3)
        bound = 1.0 / (fan_in ** 0.5)
        w = jax.random.uniform(kw, (fan_in, fan_out), jnp.float32, -bound, bound)
        b = jax.random.uniform(kb, (1, fan_out), jnp.float32, -bound, bound)
        params.append((w, b))
    return params


def pack_params(params):
    """Pack (W,b) list into one zero-padded (SLAB_ROWS, PAD) bf16 slab."""
    (w0, b0), (w1, b1), (w2, b2) = params
    slab = jnp.zeros((SLAB_ROWS, PAD), jnp.float32)
    slab = slab.at[W0_OFF:W0_OFF + w0.shape[0], :w0.shape[1]].set(w0)
    slab = slab.at[B0_OFF, :b0.shape[-1]].set(b0.reshape(-1))
    slab = slab.at[W1_OFF:W1_OFF + w1.shape[0], :w1.shape[1]].set(w1)
    slab = slab.at[B1_OFF, :b1.shape[-1]].set(b1.reshape(-1))
    slab = slab.at[W2_OFF:W2_OFF + w2.shape[0], :w2.shape[1]].set(w2)
    slab = slab.at[B2_OFF, :b2.shape[-1]].set(b2.reshape(-1))
    return slab.astype(jnp.bfloat16)


def reference_forward(x, params):
    """Pure-JAX f32 reference matching PyTorch DeepNN forward semantics."""
    h = x
    for j, (w, b) in enumerate(params):
        h = h @ w + b
        if j != len(params) - 1:
            h = jnp.tanh(h)
    return h


if __name__ == "__main__":
    key = jax.random.PRNGKey(0)
    key, kx_small, kx_big = jax.random.split(key, 3)
    params = init_params(key, LAYERS)
    slab = pack_params(params)

    # bf16 weights -> tolerance loosened vs the old pure-f32 1e-5 check.
    ATOL = RTOL = 5e-2

    # 1) Latency path: small batch, single VMEM-resident invocation.
    x_small = jax.random.normal(kx_small, (16, D_IN), jnp.float32)
    out_small = deep_nn_forward(x_small, slab)
    jax.block_until_ready(out_small)
    ref_small = reference_forward(x_small, params)
    assert out_small.shape == (16, D_OUT)
    assert jnp.allclose(out_small, ref_small, atol=ATOL, rtol=RTOL), (
        float(jnp.max(jnp.abs(out_small - ref_small))))

    # 2) Throughput path: batch grid, resident slab, parallel batch axis.
    x_big = jax.random.normal(kx_big, (512, D_IN), jnp.float32)
    out_big = deep_nn_forward(x_big, slab, batch_tile=256)
    jax.block_until_ready(out_big)
    ref_big = reference_forward(x_big, params)
    assert out_big.shape == (512, D_OUT)
    assert jnp.allclose(out_big, ref_big, atol=ATOL, rtol=RTOL), (
        float(jnp.max(jnp.abs(out_big - ref_big))))

    print("KERNEL_OK")
</pallas_src>

<mosaic_0001>
module attributes {stable_mosaic.version = 11 : i64} {
  func.func @mlp_kernel(%arg0: memref<16x32xf32, #tpu.memory_space<vmem>>, %arg1: memref<336x128xbf16, #tpu.memory_space<vmem>>, %arg2: memref<16x16xf32, #tpu.memory_space<vmem>>) attributes {dimension_semantics = [], scalar_prefetch = 0 : i64, scratch_operands = 0 : i64, tpu.core_type = #tpu.core_type<tc>} {
    %c0 = arith.constant 0 : index
    %c0_0 = arith.constant 0 : index
    %0 = vector.load %arg0[%c0, %c0_0] : memref<16x32xf32, #tpu.memory_space<vmem>>, vector<16x32xf32>
    %1 = arith.truncf %0 : vector<16x32xf32> to vector<16x32xbf16>
    %c0_1 = arith.constant 0 : index
    %c0_2 = arith.constant 0 : index
    %2 = vector.load %arg1[%c0_1, %c0_2] : memref<336x128xbf16, #tpu.memory_space<vmem>>, vector<32x128xbf16>
    %cst = arith.constant dense<0.000000e+00> : vector<16x128xf32>
    %3 = tpu.matmul %1, %2, %cst {dimension_numbers = #tpu.dot_dimension_numbers<[1], [0], [0], [1], [0, 0, 1, 1], [], []>} : vector<16x32xbf16>, vector<32x128xbf16>, vector<16x128xf32> -> vector<16x128xf32>
    %c32 = arith.constant 32 : index
    %c0_3 = arith.constant 0 : index
    %4 = vector.load %arg1[%c32, %c0_3] : memref<336x128xbf16, #tpu.memory_space<vmem>>, vector<1x128xbf16>
    %5 = arith.extf %4 : vector<1x128xbf16> to vector<1x128xf32>
    %6 = vector.broadcast %5 : vector<1x128xf32> to vector<16x128xf32>
    %7 = arith.addf %3, %6 : vector<16x128xf32>
    %8 = math.tanh %7 : vector<16x128xf32>
    %9 = arith.truncf %8 : vector<16x128xf32> to vector<16x128xbf16>
    %c48 = arith.constant 48 : index
    %c0_4 = arith.constant 0 : index
    %10 = vector.load %arg1[%c48, %c0_4] : memref<336x128xbf16, #tpu.memory_space<vmem>>, vector<128x128xbf16>
    %cst_5 = arith.constant dense<0.000000e+00> : vector<16x128xf32>
    %11 = tpu.matmul %9, %10, %cst_5 {dimension_numbers = #tpu.dot_dimension_numbers<[1], [0], [0], [1], [0, 0, 1, 1], [], []>} : vector<16x128xbf16>, vector<128x128xbf16>, vector<16x128xf32> -> vector<16x128xf32>
    %c176 = arith.constant 176 : index
    %c0_6 = arith.constant 0 : index
    %12 = vector.load %arg1[%c176, %c0_6] : memref<336x128xbf16, #tpu.memory_space<vmem>>, vector<1x128xbf16>
    %13 = arith.extf %12 : vector<1x128xbf16> to vector<1x128xf32>
    %14 = vector.broadcast %13 : vector<1x128xf32> to vector<16x128xf32>
    %15 = arith.addf %11, %14 : vector<16x128xf32>
    %16 = math.tanh %15 : vector<16x128xf32>
    %17 = arith.truncf %16 : vector<16x128xf32> to vector<16x128xbf16>
    %c192 = arith.constant 192 : index
    %c0_7 = arith.constant 0 : index
    %18 = vector.load %arg1[%c192, %c0_7] : memref<336x128xbf16, #tpu.memory_space<vmem>>, vector<128x128xbf16>
    %cst_8 = arith.constant dense<0.000000e+00> : vector<16x128xf32>
    %19 = tpu.matmul %17, %18, %cst_8 {dimension_numbers = #tpu.dot_dimension_numbers<[1], [0], [0], [1], [0, 0, 1, 1], [], []>} : vector<16x128xbf16>, vector<128x128xbf16>, vector<16x128xf32> -> vector<16x128xf32>
    %c320 = arith.constant 320 : index
    %c0_9 = arith.constant 0 : index
    %20 = vector.load %arg1[%c320, %c0_9] : memref<336x128xbf16, #tpu.memory_space<vmem>>, vector<1x128xbf16>
    %21 = arith.extf %20 : vector<1x128xbf16> to vector<1x128xf32>
    %22 = vector.broadcast %21 : vector<1x128xf32> to vector<16x128xf32>
    %23 = arith.addf %19, %22 : vector<16x128xf32>
    %24 = vector.extract_strided_slice %23 {offsets = [0, 0], sizes = [16, 16], strides = [1, 1]} : vector<16x128xf32> to vector<16x16xf32>
    %c0_10 = arith.constant 0 : index
    %c0_11 = arith.constant 0 : index
    %25 = vector.load %arg2[%c0_10, %c0_11] : memref<16x16xf32, #tpu.memory_space<vmem>>, vector<16x16xf32>
    tpu.vector_store %arg2[%c0_10, %c0_11], %24 {strides = array<i32>} : memref<16x16xf32, #tpu.memory_space<vmem>>, vector<16x16xf32>,
    return
  }
}

</mosaic_0001>

<llo_original>
// kernel: tpu_custom_call.1
$region0: #{tpu_custom_call.1}
  #allocation0 [shape = 'u32[]', space=smem, size = 0x4, offset = 0x4, fixed_abs, tag = 'smem constant byte address 0x4 - core index']
  #allocation1 [shape = 'u32[72,128]{1,0:T(1,128)}', space=vmem, size = 0x9000, scoped, tag = 'internal scratch']
  %s0 = inlined_call_operand.hbm [shape: f32[16,32], index: 0, kind: input, shape index: {}]
  %s1 = inlined_call_operand.hbm [shape: bf16[336,128], index: 1, kind: input, shape index: {}]
  %s2 = inlined_call_operand.hbm [shape: f32[16,16], index: 2, kind: output, shape index: {}]
  %s3 = sld [smem:[#allocation0]]
  $region26: #{tpu_custom_call.1} parent=0
    _
  %s5 = ssub.s32 1, %s3
  %s6 = scalar_select 0, %s5, %s3
  $region1: #{tpu_custom_call.1} parent=0
    #allocation2 [shape = 'u8[8192]{0}', space=vmem, size = 0x2000, scoped, tag = 'input window, operand 0, single buffered']
    #allocation3 [shape = 's32[1]{0}', space=sflag, size = 0x4, scoped, tag = 'scoped memory for tpu_custom_call.1']
    #allocation4 [shape = 's32[1]{0}', space=sflag, size = 0x4, scoped, tag = 'scoped memory for tpu_custom_call.1']
    #allocation5 [shape = 'u8[86016]{0}', space=vmem, size = 0x15000, scoped, tag = 'input window, operand 1, single buffered']
    #allocation6 [shape = 's32[1]{0}', space=sflag, size = 0x4, scoped, tag = 'scoped memory for tpu_custom_call.1']
    #allocation7 [shape = 'u8[8192]{0}', space=vmem, size = 0x2000, scoped, tag = 'output window, operand 0, single buffered']
    %7 = vsyncpa [#allocation3], 0
    %8 = vsyncpa [#allocation6], 0
    %9 = vsyncpa [#allocation4], 0
    // Predicated region
    $region2: #{tpu_custom_call.1} parent=1 // pred_check
      _
    $region3: #{tpu_custom_call.1} parent=1 // pred_check_branch
      %11 = sbr.rel (0) target = $region5
    $region4: #{tpu_custom_call.1} parent=1 // pred_region
      %13 = vsyncadd [#allocation3], 0
      %s14 = sshll.u32 %s0, 4
      %s15 = int_to_ptr.hbm [resolvable:$true] %s14
      %s16 = sshll.u32 [#allocation2], 4
      %s17 = int_to_ptr.vmem [resolvable:$true] %s16
      %22 = dma.hbm_to_vmem [thread:$0]  %s15, 256, %s17, [#allocation3], 128, 128, 8
    $region5: #{tpu_custom_call.1} parent=1 // pred_fallthru
      _
    // Predicated region
    $region6: #{tpu_custom_call.1} parent=1 // pred_check
      _
    $region7: #{tpu_custom_call.1} parent=1 // pred_check_branch
      %24 = sbr.rel (0) target = $region9
    $region8: #{tpu_custom_call.1} parent=1 // pred_region
      %26 = vsyncadd [#allocation6], 0
      %s27 = sshll.u32 %s1, 4
      %s28 = int_to_ptr.hbm [resolvable:$true] %s27
      %s29 = sshll.u32 [#allocation5], 4
      %s30 = int_to_ptr.vmem [resolvable:$true] %s29
      %35 = dma.hbm_to_vmem [thread:$0]  %s28, 2688, %s30, [#allocation6], 64, 64, 4
    $region9: #{tpu_custom_call.1} parent=1 // pred_fallthru
      _
    // Predicated region
    $region10: #{tpu_custom_call.1} parent=1 // pred_check
      _
    $region11: #{tpu_custom_call.1} parent=1 // pred_check_branch
      %37 = sbr.rel (0) target = $region13
    $region12: #{tpu_custom_call.1} parent=1 // pred_region
      %39 = dma.done [#allocation3], 256
    $region13: #{tpu_custom_call.1} parent=1 // pred_fallthru
      _
    // Predicated region
    $region14: #{tpu_custom_call.1} parent=1 // pred_check
      _
    $region15: #{tpu_custom_call.1} parent=1 // pred_check_branch
      %41 = sbr.rel (0) target = $region17
    $region16: #{tpu_custom_call.1} parent=1 // pred_region
      %43 = dma.done [#allocation6], 2688
    $region17: #{tpu_custom_call.1} parent=1 // pred_fallthru
      _
    %v45 = vld [vmem:[#allocation2] sm:$0xff]
    %v46 = vld [vmem:[#allocation2 + $0x8] sm:$0xff]
    %v47 = vpack.c.bf16 %v46, %v45
    %v48 = vld [vmem:[#allocation5] sm:$0xf]
    %v49 = vld [vmem:[#allocation5 + $0x4] sm:$0xf]
    %v50 = vld [vmem:[#allocation5 + $0x8] sm:$0xf]
    %v51 = vld [vmem:[#allocation5 + $0xc] sm:$0xf]
    %v52 = vld [vmem:[#allocation5 + $0x10] sm:$0x1]
    %v53 = vunpack.c.l.bf16 %v52
    %v54 = vperm.slane %v53, 0
    %v59 = vunpack.c.l.b16 %v48
    %v60 = vunpack.c.l.b16 %v49
    %v61 = vunpack.c.l.b16 %v50
    %v62 = vunpack.c.l.b16 %v51
    %v63 = vpack.c.b16 %v60, %v59
    %v64 = vpack.c.b16 %v62, %v61
    %vm67 = vcmask 261120
    %v69 = vsel %vm67, %v47, 0
    %71 = vmatpush.bf16.msra.mxu0 0
    %72 = vmatpush.bf16.msra.mxu0 0
    %73 = vmatpush.bf16.msra.mxu0 0
    %74 = vmatpush.bf16.msra.mxu0 0
    %75 = vmatpush.bf16.msra.mxu0 0
    %76 = vmatpush.bf16.msra.mxu0 0
    %77 = vmatpush.bf16.msra.mxu0 %v64
    %78 = vmatpush.bf16.msra.mxu0 %v63
    %79 = vmatmul.bf16.gmra.mxu0 %v69
    %v80 = vpop.f32.mrf.mxu0
    %v81 = vadd.f32 %v54, %v80
    %v82 = vpop.f32.mrf.mxu0
    %v83 = vadd.f32 %v54, %v82
    %84 = vdwg.mxu0
    %v85 = vtanh.pop %v81
    %v86 = vtanh.pop %v83
    %v87 = vpack.c.bf16 %v86, %v85
    %v88 = vld [vmem:[#allocation5 + $0x18] sm:$0xf]
    %v89 = vld [vmem:[#allocation5 + $0x1c] sm:$0xf]
    %v90 = vld [vmem:[#allocation5 + $0x20] sm:$0xf]
    %v91 = vld [vmem:[#allocation5 + $0x24] sm:$0xf]
    %v92 = vld [vmem:[#allocation5 + $0x28] sm:$0xf]
    %v93 = vld [vmem:[#allocation5 + $0x2c] sm:$0xf]
    %v94 = vld [vmem:[#allocation5 + $0x30] sm:$0xf]
    %v95 = vld [vmem:[#allocation5 + $0x34] sm:$0xf]
    %v96 = vld [vmem:[#allocation5 + $0x38] sm:$0xf]
    %v97 = vld [vmem:[#allocation5 + $0x3c] sm:$0xf]
    %v98 = vld [vmem:[#allocation5 + $0x40] sm:$0xf]
    %v99 = vld [vmem:[#allocation5 + $0x44] sm:$0xf]
    %v100 = vld [vmem:[#allocation5 + $0x48] sm:$0xf]
    %v101 = vld [vmem:[#allocation5 + $0x4c] sm:$0xf]
    %v102 = vld [vmem:[#allocation5 + $0x50] sm:$0xf]
    %v103 = vld [vmem:[#allocation5 + $0x54] sm:$0xf]
    %v104 = vld [vmem:[#allocation5 + $0x58] sm:$0x1]
    %v105 = vunpack.c.l.bf16 %v104
    %v106 = vperm.slane %v105, 0
    %v123 = vunpack.c.l.b16 %v88
    %v124 = vunpack.c.l.b16 %v89
    %v125 = vunpack.c.l.b16 %v90
    %v126 = vunpack.c.l.b16 %v91
    %v127 = vunpack.c.l.b16 %v92
    %v128 = vunpack.c.l.b16 %v93
    %v129 = vunpack.c.l.b16 %v94
    %v130 = vunpack.c.l.b16 %v95
    %v131 = vunpack.c.l.b16 %v96
    %v132 = vunpack.c.l.b16 %v97
    %v133 = vunpack.c.l.b16 %v98
    %v134 = vunpack.c.l.b16 %v99
    %v135 = vunpack.c.l.b16 %v100
    %v136 = vunpack.c.l.b16 %v101
    %v137 = vunpack.c.l.b16 %v102
    %v138 = vunpack.c.l.b16 %v103
    %v139 = vpack.c.b16 %v124, %v123
    %v140 = vpack.c.b16 %v126, %v125
    %v141 = vpack.c.b16 %v128, %v127
    %v142 = vpack.c.b16 %v130, %v129
    %v143 = vpack.c.b16 %v132, %v131
    %v144 = vpack.c.b16 %v134, %v133
    %v145 = vpack.c.b16 %v136, %v135
    %v146 = vpack.c.b16 %v138, %v137
    %155 = vmatpush.bf16.msra.mxu0 %v146
    %156 = vmatpush.bf16.msra.mxu0 %v145
    %157 = vmatpush.bf16.msra.mxu0 %v144
    %158 = vmatpush.bf16.msra.mxu0 %v143
    %159 = vmatpush.bf16.msra.mxu0 %v142
    %160 = vmatpush.bf16.msra.mxu0 %v141
    %161 = vmatpush.bf16.msra.mxu0 %v140
    %162 = vmatpush.bf16.msra.mxu0 %v139
    %163 = vmatmul.bf16.gmra.mxu0 %v87
    %v164 = vpop.f32.mrf.mxu0
    %v165 = vadd.f32 %v106, %v164
    %v166 = vpop.f32.mrf.mxu0
    %v167 = vadd.f32 %v106, %v166
    %168 = vdwg.mxu0
    %v169 = vtanh.pop %v165
    %v170 = vtanh.pop %v167
    %v171 = vpack.c.bf16 %v170, %v169
    %v172 = vld [vmem:[#allocation5 + $0x60] sm:$0xf]
    %v173 = vld [vmem:[#allocation5 + $0x64] sm:$0xf]
    %v174 = vld [vmem:[#allocation5 + $0x68] sm:$0xf]
    %v175 = vld [vmem:[#allocation5 + $0x6c] sm:$0xf]
    %v176 = vld [vmem:[#allocation5 + $0x70] sm:$0xf]
    %v177 = vld [vmem:[#allocation5 + $0x74] sm:$0xf]
    %v178 = vld [vmem:[#allocation5 + $0x78] sm:$0xf]
    %v179 = vld [vmem:[#allocation5 + $0x7c] sm:$0xf]
    %v180 = vld [vmem:[#allocation5 + $0x80] sm:$0xf]
    %v181 = vld [vmem:[#allocation5 + $0x84] sm:$0xf]
    %v182 = vld [vmem:[#allocation5 + $0x88] sm:$0xf]
    %v183 = vld [vmem:[#allocation5 + $0x8c] sm:$0xf]
    %v184 = vld [vmem:[#allocation5 + $0x90] sm:$0xf]
    %v185 = vld [vmem:[#allocation5 + $0x94] sm:$0xf]
    %v186 = vld [vmem:[#allocation5 + $0x98] sm:$0xf]
    %v187 = vld [vmem:[#allocation5 + $0x9c] sm:$0xf]
    %v188 = vld [vmem:[#allocation5 + $0xa0] sm:$0x1]
    %v189 = vunpack.c.l.bf16 %v188
    %v190 = vperm.slane %v189, 0
    %v207 = vunpack.c.l.b16 %v172
    %v208 = vunpack.c.l.b16 %v173
    %v209 = vunpack.c.l.b16 %v174
    %v210 = vunpack.c.l.b16 %v175
    %v211 = vunpack.c.l.b16 %v176
    %v212 = vunpack.c.l.b16 %v177
    %v213 = vunpack.c.l.b16 %v178
    %v214 = vunpack.c.l.b16 %v179
    %v215 = vunpack.c.l.b16 %v180
    %v216 = vunpack.c.l.b16 %v181
    %v217 = vunpack.c.l.b16 %v182
    %v218 = vunpack.c.l.b16 %v183
    %v219 = vunpack.c.l.b16 %v184
    %v220 = vunpack.c.l.b16 %v185
    %v221 = vunpack.c.l.b16 %v186
    %v222 = vunpack.c.l.b16 %v187
    %v223 = vpack.c.b16 %v208, %v207
    %v224 = vpack.c.b16 %v210, %v209
    %v225 = vpack.c.b16 %v212, %v211
    %v226 = vpack.c.b16 %v214, %v213
    %v227 = vpack.c.b16 %v216, %v215
    %v228 = vpack.c.b16 %v218, %v217
    %v229 = vpack.c.b16 %v220, %v219
    %v230 = vpack.c.b16 %v222, %v221
    %239 = vmatpush.bf16.msra.mxu0 %v230
    %240 = vmatpush.bf16.msra.mxu0 %v229
    %241 = vmatpush.bf16.msra.mxu0 %v228
    %242 = vmatpush.bf16.msra.mxu0 %v227
    %243 = vmatpush.bf16.msra.mxu0 %v226
    %244 = vmatpush.bf16.msra.mxu0 %v225
    %245 = vmatpush.bf16.msra.mxu0 %v224
    %246 = vmatpush.bf16.msra.mxu0 %v223
    %247 = vmatmul.bf16.gmra.mxu0 %v171
    %v248 = vpop.f32.mrf.mxu0
    %v249 = vadd.f32 %v190, %v248
    %v250 = vpop.f32.mrf.mxu0
    %v251 = vadd.f32 %v190, %v250
    %252 = vdwg.mxu0
    %vm253 = vcmask 130048
    %254 = vst.msk [vmem:[#allocation7] sm:$0xff] %vm253, %v249
    %255 = vst.msk [vmem:[#allocation7 + $0x8] sm:$0xff] %vm253, %v251
    // Predicated region
    $region18: #{tpu_custom_call.1} parent=1 // pred_check
      _
    $region19: #{tpu_custom_call.1} parent=1 // pred_check_branch
      %257 = sbr.rel (0) target = $region21
    $region20: #{tpu_custom_call.1} parent=1 // pred_region
      %259 = vsyncadd [#allocation4], 0
      %s260 = sshll.u32 [#allocation7], 4
      %s261 = int_to_ptr.vmem [resolvable:$true] %s260
      %s262 = sshll.u32 %s2, 4
      %s263 = int_to_ptr.hbm [resolvable:$true] %s262
      %268 = dma.vmem_to_hbm [thread:$0]  %s261, 256, %s263, [#allocation4], 128, 128, 8
    $region21: #{tpu_custom_call.1} parent=1 // pred_fallthru
      _
    // Predicated region
    $region22: #{tpu_custom_call.1} parent=1 // pred_check
      _
    $region23: #{tpu_custom_call.1} parent=1 // pred_check_branch
      %270 = sbr.rel (0) target = $region25
    $region24: #{tpu_custom_call.1} parent=1 // pred_region
      %272 = dma.done [#allocation4], 256
    $region25: #{tpu_custom_call.1} parent=1 // pred_fallthru
      _
    %273 = vsyncpa [#allocation3], 1
    %274 = vsyncpa [#allocation6], 1
    %275 = vsyncpa [#allocation4], 1

</llo_original>
